<compile_context>
chip_gen: v7x
topology: tpu7x:2x2x1
jax: 0.10.0
libtpu: 0.0.40
codegen_flags: <defaults>
</compile_context>

<pallas_src>
import jax
import jax.numpy as jnp
from jax import lax
from jax.experimental import pallas as pl
from jax.experimental.pallas import tpu as pltpu

F_DIM = 20  # module width: nn.Linear(20, 20), rand_weight (20, 20)


def _round_up(n, m):
    return -(-n // m) * m


# Sublane-aligned row offsets inside the packed parameter slab.
_OFF_WF = 0                                   # W^T @ rand_weight      (F rows)
_OFF_WT = _round_up(F_DIM, 8)                 # W^T                    (F rows)
_OFF_BF = _round_up(_OFF_WT + F_DIM, 8)       # b @ rand_weight + 1    (1 row)
_OFF_B = _round_up(_OFF_BF + 1, 8)            # b                      (1 row)
_SLAB_ROWS = _round_up(_OFF_B + 1, 8)         # = 64 for F = 20


def fixed_hidden_mlp_kernel(x_ref, params_ref, out_ref):
    F = F_DIM
    x = x_ref[...]                                      # (B, F) f32
    w_fused = params_ref[_OFF_WF:_OFF_WF + F, :]        # (F, F) = W^T @ rand_weight
    wt = params_ref[_OFF_WT:_OFF_WT + F, :]             # (F, F) = W^T
    b_fused = params_ref[_OFF_BF:_OFF_BF + 1, :]        # (1, F) = b @ rand_weight + 1
    b = params_ref[_OFF_B:_OFF_B + 1, :]                # (1, F)

    # relu(linear(x) @ rand_weight + 1), folded into a single matmul.
    h = jnp.maximum(
        jnp.dot(x, w_fused, preferred_element_type=jnp.float32) + b_fused, 0.0)
    # Second application of the shared linear layer.
    h = jnp.dot(h, wt, preferred_element_type=jnp.float32) + b

    # Fused reductions: one cross-lane pass gives row-sums of h and |h|.
    B = h.shape[0]
    pair = jnp.concatenate([h, jnp.abs(h)], axis=0)          # (2B, F)
    row = jnp.sum(pair, axis=1, keepdims=True)               # (2B, 1)
    total = jnp.sum(row[:B, :], axis=0, keepdims=True)       # (1, 1) = sum(h)
    abs_sum = jnp.sum(row[B:, :], axis=0, keepdims=True)     # (1, 1) = sum(|h|)

    # "while abs_sum > 1: h /= 2": halving every element exactly halves both
    # sums (no subnormals here), so the loop applies scale = 2^-n with
    #   n = ceil(log2(abs_sum)) if abs_sum > 1 else 0,
    # extracted exactly from the f32 exponent/mantissa bits.
    bits = pltpu.bitcast(abs_sum, jnp.int32)                 # abs_sum >= 0 -> sign bit 0
    exp = (bits >> 23) & 0xFF                                # biased exponent
    mant = bits & 0x7FFFFF
    n = jnp.where(mant == 0, exp - 127, exp - 126)           # exact ceil(log2(abs_sum))
    n = jnp.clip(n, 0, 126)                                  # abs_sum <= 1 -> n = 0
    scale = pltpu.bitcast((127 - n) << 23, jnp.float32)      # exact 2^-n (normal f32)

    out_ref[...] = total * scale


def pack_params(w, b, rand_weight):
    """Fold the shared-linear -> rand_weight matmul and pack all parameters
    into one sublane-aligned (_SLAB_ROWS, F) f32 slab (single HBM->VMEM DMA,
    aligned in-kernel slices).  Parameter-only: call once, reuse across calls."""
    F = w.shape[0]
    w = w.astype(jnp.float32)
    b = b.astype(jnp.float32)
    rand_weight = rand_weight.astype(jnp.float32)
    # W_fused = W^T @ rand_weight, contracted directly (no explicit transpose op).
    w_fused = lax.dot_general(
        w, rand_weight,
        dimension_numbers=(((0,), (0,)), ((), ())),
        preferred_element_type=jnp.float32)
    b_fused = b @ rand_weight + 1.0
    slab = jnp.zeros((_SLAB_ROWS, F), jnp.float32)
    slab = slab.at[_OFF_WF:_OFF_WF + F].set(w_fused)
    slab = slab.at[_OFF_WT:_OFF_WT + F].set(w.T)
    slab = slab.at[_OFF_BF].set(b_fused)
    slab = slab.at[_OFF_B].set(b)
    return slab


def _forward_packed(x, params):
    vmem = pltpu.MemorySpace.VMEM
    out = pl.pallas_call(
        fixed_hidden_mlp_kernel,
        out_shape=jax.ShapeDtypeStruct((1, 1), jnp.float32),
        in_specs=[
            pl.BlockSpec(memory_space=vmem),   # x       (B, F)
            pl.BlockSpec(memory_space=vmem),   # params  (_SLAB_ROWS, F)
        ],
        out_specs=pl.BlockSpec(memory_space=vmem),
    )(x.astype(jnp.float32), params)
    return out[0, 0]


# Use this when parameters are fixed across calls: pack once, apply many times.
apply_packed = jax.jit(_forward_packed)


@jax.jit
def fixed_hidden_mlp(x, w, b, rand_weight):
    """x: (B, 20); w: (20, 20) PyTorch-style (out, in); b: (20,); rand_weight: (20, 20).
    Fully jitted: the parameter fold/pack fuses into the same executable as
    the single pallas_call (one dispatch end-to-end)."""
    return _forward_packed(x, pack_params(w, b, rand_weight))


def reference(x, w, b, rand_weight):
    h = x @ w.T + b
    h = jnp.maximum(h @ rand_weight + 1.0, 0.0)
    h = h @ w.T + b

    def cond(carry):
        return jnp.sum(jnp.abs(carry)) > 1.0

    def body(carry):
        return carry / 2.0

    h = lax.while_loop(cond, body, h)
    return jnp.sum(h)


if __name__ == "__main__":
    key = jax.random.PRNGKey(0)
    k_x, k_rw, k_w, k_b = jax.random.split(key, 4)

    B, F = 2, F_DIM
    x = jax.random.uniform(k_x, (B, F), dtype=jnp.float32)             # torch.rand(2, 20)
    rand_weight = jax.random.uniform(k_rw, (F, F), dtype=jnp.float32)  # torch.rand((20, 20))

    # nn.Linear(20, 20) default init: U(-1/sqrt(in), 1/sqrt(in))
    bound = 1.0 / jnp.sqrt(jnp.float32(F))
    w = jax.random.uniform(k_w, (F, F), dtype=jnp.float32, minval=-bound, maxval=bound)
    b = jax.random.uniform(k_b, (F,), dtype=jnp.float32, minval=-bound, maxval=bound)

    out = fixed_hidden_mlp(x, w, b, rand_weight)
    out = jax.block_until_ready(out)

    ref = reference(x, w, b, rand_weight)
    assert jnp.allclose(out, ref, rtol=1e-5, atol=1e-5), (out, ref)

    print("KERNEL_OK")
</pallas_src>

<mosaic_0001>
module attributes {stable_mosaic.version = 11 : i64} {
  func.func @fixed_hidden_mlp_kernel(%arg0: memref<2x20xf32, #tpu.memory_space<vmem>>, %arg1: memref<64x20xf32, #tpu.memory_space<vmem>>, %arg2: memref<1x1xf32, #tpu.memory_space<vmem>>) attributes {dimension_semantics = [], scalar_prefetch = 0 : i64, scratch_operands = 0 : i64, tpu.core_type = #tpu.core_type<tc>} {
    %c0 = arith.constant 0 : index
    %c0_0 = arith.constant 0 : index
    %0 = vector.load %arg0[%c0, %c0_0] : memref<2x20xf32, #tpu.memory_space<vmem>>, vector<2x20xf32>
    %c0_1 = arith.constant 0 : index
    %c0_2 = arith.constant 0 : index
    %1 = vector.load %arg1[%c0_1, %c0_2] : memref<64x20xf32, #tpu.memory_space<vmem>>, vector<20x20xf32>
    %c24 = arith.constant 24 : index
    %c0_3 = arith.constant 0 : index
    %2 = vector.load %arg1[%c24, %c0_3] : memref<64x20xf32, #tpu.memory_space<vmem>>, vector<20x20xf32>
    %c48 = arith.constant 48 : index
    %c0_4 = arith.constant 0 : index
    %3 = vector.load %arg1[%c48, %c0_4] : memref<64x20xf32, #tpu.memory_space<vmem>>, vector<1x20xf32>
    %c56 = arith.constant 56 : index
    %c0_5 = arith.constant 0 : index
    %4 = vector.load %arg1[%c56, %c0_5] : memref<64x20xf32, #tpu.memory_space<vmem>>, vector<1x20xf32>
    %cst = arith.constant dense<0.000000e+00> : vector<2x20xf32>
    %5 = tpu.matmul %0, %1, %cst {dimension_numbers = #tpu.dot_dimension_numbers<[1], [0], [0], [1], [0, 0, 1, 1], [], []>} : vector<2x20xf32>, vector<20x20xf32>, vector<2x20xf32> -> vector<2x20xf32>
    %6 = vector.broadcast %3 : vector<1x20xf32> to vector<2x20xf32>
    %7 = arith.addf %5, %6 : vector<2x20xf32>
    %cst_6 = arith.constant 0.000000e+00 : f32
    %8 = vector.broadcast %cst_6 : f32 to vector<2x20xf32>
    %9 = arith.maximumf %7, %8 : vector<2x20xf32>
    %cst_7 = arith.constant dense<0.000000e+00> : vector<2x20xf32>
    %10 = tpu.matmul %9, %2, %cst_7 {dimension_numbers = #tpu.dot_dimension_numbers<[1], [0], [0], [1], [0, 0, 1, 1], [], []>} : vector<2x20xf32>, vector<20x20xf32>, vector<2x20xf32> -> vector<2x20xf32>
    %11 = vector.broadcast %4 : vector<1x20xf32> to vector<2x20xf32>
    %12 = arith.addf %10, %11 : vector<2x20xf32>
    %13 = math.absf %12 : vector<2x20xf32>
    %14 = tpu.concatenate %12, %13 in 0 : vector<2x20xf32>, vector<2x20xf32> -> vector<4x20xf32>
    %cst_8 = arith.constant dense<0.000000e+00> : vector<4xf32>
    %15 = vector.multi_reduction <add>, %14, %cst_8 [1] : vector<4x20xf32> to vector<4xf32>
    %16 = vector.shape_cast %15 : vector<4xf32> to vector<4x1xf32>
    %17 = vector.extract_strided_slice %16 {offsets = [0, 0], sizes = [2, 1], strides = [1, 1]} : vector<4x1xf32> to vector<2x1xf32>
    %cst_9 = arith.constant dense<0.000000e+00> : vector<1xf32>
    %18 = vector.multi_reduction <add>, %17, %cst_9 [0] : vector<2x1xf32> to vector<1xf32>
    %19 = vector.shape_cast %18 : vector<1xf32> to vector<1x1xf32>
    %20 = vector.extract_strided_slice %16 {offsets = [2, 0], sizes = [2, 1], strides = [1, 1]} : vector<4x1xf32> to vector<2x1xf32>
    %cst_10 = arith.constant dense<0.000000e+00> : vector<1xf32>
    %21 = vector.multi_reduction <add>, %20, %cst_10 [0] : vector<2x1xf32> to vector<1xf32>
    %22 = vector.shape_cast %21 : vector<1xf32> to vector<1x1xf32>
    %23 = tpu.bitcast %22 : vector<1x1xf32> -> vector<1x1xi32>
    %c23_i32 = arith.constant 23 : i32
    %24 = vector.broadcast %c23_i32 : i32 to vector<1x1xi32>
    %25 = arith.shrsi %23, %24 : vector<1x1xi32>
    %c255_i32 = arith.constant 255 : i32
    %26 = vector.broadcast %c255_i32 : i32 to vector<1x1xi32>
    %27 = arith.andi %25, %26 : vector<1x1xi32>
    %c8388607_i32 = arith.constant 8388607 : i32
    %28 = vector.broadcast %c8388607_i32 : i32 to vector<1x1xi32>
    %29 = arith.andi %23, %28 : vector<1x1xi32>
    %c0_i32 = arith.constant 0 : i32
    %30 = vector.broadcast %c0_i32 : i32 to vector<1x1xi32>
    %31 = arith.cmpi eq, %29, %30 : vector<1x1xi32>
    %c127_i32 = arith.constant 127 : i32
    %32 = vector.broadcast %c127_i32 : i32 to vector<1x1xi32>
    %33 = arith.subi %27, %32 : vector<1x1xi32>
    %c126_i32 = arith.constant 126 : i32
    %34 = vector.broadcast %c126_i32 : i32 to vector<1x1xi32>
    %35 = arith.subi %27, %34 : vector<1x1xi32>
    %36 = arith.select %31, %33, %35 : vector<1x1xi1>, vector<1x1xi32>
    %c0_i32_11 = arith.constant 0 : i32
    %c126_i32_12 = arith.constant 126 : i32
    %37 = vector.broadcast %c0_i32_11 : i32 to vector<1x1xi32>
    %38 = arith.maxsi %37, %36 : vector<1x1xi32>
    %39 = vector.broadcast %c126_i32_12 : i32 to vector<1x1xi32>
    %40 = arith.minsi %39, %38 : vector<1x1xi32>
    %c127_i32_13 = arith.constant 127 : i32
    %41 = vector.broadcast %c127_i32_13 : i32 to vector<1x1xi32>
    %42 = arith.subi %41, %40 : vector<1x1xi32>
    %c23_i32_14 = arith.constant 23 : i32
    %43 = vector.broadcast %c23_i32_14 : i32 to vector<1x1xi32>
    %44 = arith.shli %42, %43 : vector<1x1xi32>
    %45 = tpu.bitcast %44 : vector<1x1xi32> -> vector<1x1xf32>
    %46 = arith.mulf %19, %45 : vector<1x1xf32>
    %c0_15 = arith.constant 0 : index
    %c0_16 = arith.constant 0 : index
    %47 = vector.load %arg2[%c0_15, %c0_16] : memref<1x1xf32, #tpu.memory_space<vmem>>, vector<1x1xf32>
    tpu.vector_store %arg2[%c0_15, %c0_16], %46 {strides = array<i32>} : memref<1x1xf32, #tpu.memory_space<vmem>>, vector<1x1xf32>,
    return
  }
}

</mosaic_0001>

<llo_original>
// kernel: fixed_hidden_mlp.1
$region0: #{fixed_hidden_mlp.1}
  #allocation0 [shape = 'u32[]', space=smem, size = 0x4, offset = 0x4, fixed_abs, tag = 'smem constant byte address 0x4 - core index']
  #allocation1 [shape = 'u32[144,128]{1,0:T(1,128)}', space=vmem, size = 0x12000, scoped, tag = 'internal scratch']
  %s0 = inlined_call_operand.vmem [shape: f32[2,20], index: 0, kind: input, shape index: {}]
  %s1 = inlined_call_operand.vmem [shape: f32[64,20], index: 1, kind: input, shape index: {}]
  %s2 = inlined_call_operand.hbm [shape: f32[1,1], index: 2, kind: output, shape index: {}]
  %s3 = sld [smem:[#allocation0]]
  $region18: #{fixed_hidden_mlp.1} parent=0
    _
  %s5 = ssub.s32 1, %s3
  %s6 = scalar_select 0, %s5, %s3
  $region1: #{fixed_hidden_mlp.1} parent=0
    #allocation2 [shape = 'u8[512]{0}', space=vmem, size = 0x400, scoped, tag = 'output window, operand 0, single buffered']
    #allocation3 [shape = 's32[1]{0}', space=sflag, size = 0x4, scoped, tag = 'scoped memory for fixed_hidden_mlp.1']
    %7 = vsyncpa [#allocation3], 0
    // Predicated region
    $region2: #{fixed_hidden_mlp.1} parent=1 // pred_check
      _
    $region3: #{fixed_hidden_mlp.1} parent=1 // pred_check_branch
      %9 = sbr.rel (0) target = $region5
    $region4: #{fixed_hidden_mlp.1} parent=1 // pred_region
      _
    $region5: #{fixed_hidden_mlp.1} parent=1 // pred_fallthru
      _
    // Predicated region
    $region6: #{fixed_hidden_mlp.1} parent=1 // pred_check
      _
    $region7: #{fixed_hidden_mlp.1} parent=1 // pred_check_branch
      %11 = sbr.rel (0) target = $region9
    $region8: #{fixed_hidden_mlp.1} parent=1 // pred_region
      _
    $region9: #{fixed_hidden_mlp.1} parent=1 // pred_fallthru
      _
    %v12 = vld [vmem:[%s0] sm:$0x3]
    %v13 = vld [vmem:[%s1] sm:$0xff]
    %v14 = vld [vmem:[%s1 + $0x8] sm:$0xff]
    %v15 = vld [vmem:[%s1 + $0x10] sm:$0xf]
    %v16 = vld [vmem:[%s1 + $0x18] sm:$0xff]
    %v17 = vld [vmem:[%s1 + $0x20] sm:$0xff]
    %v18 = vld [vmem:[%s1 + $0x28] sm:$0xf]
    %v19 = vld [vmem:[%s1 + $0x30] sm:$0x1]
    %v20 = vld [vmem:[%s1 + $0x38] sm:$0x1]
    %v21 = vlaneseq
    %v22 = vshrl.u32 %v21, 7
    %v23 = vsub.s32 0, %v22
    %v24 = vrot.slane %v19, %v23
    %vm25 = vcmask 162816
    %v27 = vsel %vm25, %v12, 0
    %vm29 = vcmask 1043456
    %v31 = vsel %vm29, %v15, 0
    %33 = vmatprep.subr.mxu0 0.0
    %34 = vmatpush1.msra.mxu0 %v13
    %35 = vmatprep.subr.mxu0 0.0
    %36 = vmatpush1.msra.mxu0 %v14
    %37 = vmatprep.subr.mxu0 0.0
    %38 = vmatpush1.msra.mxu0 %v31
    %39 = vmatprep.subr.mxu0 0.0
    %40 = vmatpush1.msra.mxu0 0.0
    %41 = vmatprep.subr.mxu0 0.0
    %42 = vmatpush1.msra.mxu0 0.0
    %43 = vmatprep.subr.mxu0 0.0
    %44 = vmatpush1.msra.mxu0 0.0
    %45 = vmatprep.subr.mxu0 0.0
    %46 = vmatpush1.msra.mxu0 0.0
    %47 = vmatprep.subr.mxu0 0.0
    %48 = vmatpush1.msra.mxu0 0.0
    %49 = vmatprep.subr.mxu0 0.0
    %50 = vmatpush1.msra.mxu0 0.0
    %51 = vmatprep.subr.mxu0 0.0
    %52 = vmatpush1.msra.mxu0 0.0
    %53 = vmatprep.subr.mxu0 0.0
    %54 = vmatpush1.msra.mxu0 0.0
    %55 = vmatprep.subr.mxu0 0.0
    %56 = vmatpush1.msra.mxu0 0.0
    %57 = vmatprep.subr.mxu0 0.0
    %58 = vmatpush1.msra.mxu0 0.0
    %59 = vmatprep.subr.mxu0 0.0
    %60 = vmatpush1.msra.mxu0 0.0
    %61 = vmatprep.subr.mxu0 0.0
    %62 = vmatpush1.msra.mxu0 0.0
    %63 = vmatprep.subr.mxu0 0.0
    %64 = vmatpush1.msra.mxu0 0.0
    %65 = vmatprep.subr.mxu0 0.0
    %66 = vmatpush1.msra.mxu0 0.0
    %67 = vmatprep.subr.mxu0 0.0
    %68 = vmatpush1.msra.mxu0 0.0
    %69 = vmatprep.subr.mxu0 0.0
    %70 = vmatpush1.msra.mxu0 0.0
    %71 = vmatprep.subr.mxu0 0.0
    %72 = vmatpush1.msra.mxu0 0.0
    %73 = vmatprep.subr.mxu0 0.0
    %74 = vmatpush1.msra.mxu0 0.0
    %75 = vmatprep.subr.mxu0 0.0
    %76 = vmatpush1.msra.mxu0 0.0
    %77 = vmatprep.subr.mxu0 0.0
    %78 = vmatpush1.msra.mxu0 0.0
    %79 = vmatprep.subr.mxu0 0.0
    %80 = vmatpush1.msra.mxu0 0.0
    %81 = vmatprep.subr.mxu0 0.0
    %82 = vmatpush1.msra.mxu0 0.0
    %83 = vmatprep.subr.mxu0 0.0
    %84 = vmatpush1.msra.mxu0 0.0
    %85 = vmatprep.subr.mxu0 0.0
    %86 = vmatpush1.msra.mxu0 0.0
    %87 = vmatprep.subr.mxu0 0.0
    %88 = vmatpush1.msra.mxu0 0.0
    %89 = vmatprep.subr.mxu0 0.0
    %90 = vmatpush1.msra.mxu0 0.0
    %91 = vmatprep.subr.mxu0 0.0
    %92 = vmatpush1.msra.mxu0 0.0
    %93 = vmatprep.subr.mxu0 0.0
    %94 = vmatpush1.msra.mxu0 0.0
    %95 = vmatprep.subr.mxu0 0.0
    %96 = vmatpush1.msra.mxu0 0.0
    %97 = vmatprep.mubr.f32.mxu0 0.0
    %98 = vmatmul.mubr.f32.gmra.mrb[0].mxu0 %v27
    %v99 = vpop.f32.mrb[0].mxu0
    %v100 = vadd.f32 %v24, %v99
    %v101 = vpop.f32.mrb[0].mxu0
    %102 = vdwg.mxu0
    %v103 = vmax.f32 %v100, 0.0
    %v104 = vlaneseq
    %v105 = vshrl.u32 %v104, 7
    %v106 = vsub.s32 0, %v105
    %v107 = vrot.slane %v20, %v106
    %v109 = vsel %vm25, %v103, 0
    %v112 = vsel %vm29, %v18, 0
    %114 = vmatprep.subr.mxu0 0.0
    %115 = vmatpush1.msra.mxu0 %v16
    %116 = vmatprep.subr.mxu0 0.0
    %117 = vmatpush1.msra.mxu0 %v17
    %118 = vmatprep.subr.mxu0 0.0
    %119 = vmatpush1.msra.mxu0 %v112
    %120 = vmatprep.subr.mxu0 0.0
    %121 = vmatpush1.msra.mxu0 0.0
    %122 = vmatprep.subr.mxu0 0.0
    %123 = vmatpush1.msra.mxu0 0.0
    %124 = vmatprep.subr.mxu0 0.0
    %125 = vmatpush1.msra.mxu0 0.0
    %126 = vmatprep.subr.mxu0 0.0
    %127 = vmatpush1.msra.mxu0 0.0
    %128 = vmatprep.subr.mxu0 0.0
    %129 = vmatpush1.msra.mxu0 0.0
    %130 = vmatprep.subr.mxu0 0.0
    %131 = vmatpush1.msra.mxu0 0.0
    %132 = vmatprep.subr.mxu0 0.0
    %133 = vmatpush1.msra.mxu0 0.0
    %134 = vmatprep.subr.mxu0 0.0
    %135 = vmatpush1.msra.mxu0 0.0
    %136 = vmatprep.subr.mxu0 0.0
    %137 = vmatpush1.msra.mxu0 0.0
    %138 = vmatprep.subr.mxu0 0.0
    %139 = vmatpush1.msra.mxu0 0.0
    %140 = vmatprep.subr.mxu0 0.0
    %141 = vmatpush1.msra.mxu0 0.0
    %142 = vmatprep.subr.mxu0 0.0
    %143 = vmatpush1.msra.mxu0 0.0
    %144 = vmatprep.subr.mxu0 0.0
    %145 = vmatpush1.msra.mxu0 0.0
    %146 = vmatprep.subr.mxu0 0.0
    %147 = vmatpush1.msra.mxu0 0.0
    %148 = vmatprep.subr.mxu0 0.0
    %149 = vmatpush1.msra.mxu0 0.0
    %150 = vmatprep.subr.mxu0 0.0
    %151 = vmatpush1.msra.mxu0 0.0
    %152 = vmatprep.subr.mxu0 0.0
    %153 = vmatpush1.msra.mxu0 0.0
    %154 = vmatprep.subr.mxu0 0.0
    %155 = vmatpush1.msra.mxu0 0.0
    %156 = vmatprep.subr.mxu0 0.0
    %157 = vmatpush1.msra.mxu0 0.0
    %158 = vmatprep.subr.mxu0 0.0
    %159 = vmatpush1.msra.mxu0 0.0
    %160 = vmatprep.subr.mxu0 0.0
    %161 = vmatpush1.msra.mxu0 0.0
    %162 = vmatprep.subr.mxu0 0.0
    %163 = vmatpush1.msra.mxu0 0.0
    %164 = vmatprep.subr.mxu0 0.0
    %165 = vmatpush1.msra.mxu0 0.0
    %166 = vmatprep.subr.mxu0 0.0
    %167 = vmatpush1.msra.mxu0 0.0
    %168 = vmatprep.subr.mxu0 0.0
    %169 = vmatpush1.msra.mxu0 0.0
    %170 = vmatprep.subr.mxu0 0.0
    %171 = vmatpush1.msra.mxu0 0.0
    %172 = vmatprep.subr.mxu0 0.0
    %173 = vmatpush1.msra.mxu0 0.0
    %174 = vmatprep.subr.mxu0 0.0
    %175 = vmatpush1.msra.mxu0 0.0
    %176 = vmatprep.subr.mxu0 0.0
    %177 = vmatpush1.msra.mxu0 0.0
    %178 = vmatprep.mubr.f32.mxu0 0.0
    %179 = vmatmul.mubr.f32.gmra.mrb[0].mxu0 %v109
    %v180 = vpop.f32.mrb[0].mxu0
    %v181 = vadd.f32 %v107, %v180
    %v182 = vpop.f32.mrb[0].mxu0
    %183 = vdwg.mxu0
    %v184 = vand.u32 2147483647, %v181
    %v186 = vrot.slane %v184, 6
    %vm188 = vcmask 1041408
    %v189 = vsel %vm188, %v181, %v186
    %vm190 = vcmask 158720
    %v191 = vsel %vm190, %v189, 0.0
    %192 = vadd.xlane.f32.xlu0 %v191
    %v193 = vpop.xlane.xlu0 %192
    %v194 = vsel %vm188, %v193, 0.0
    %v195 = vrot.slane %v194, 4
    %v196 = vadd.f32 %v194, %v195
    %v197 = vrot.slane %v196, 2
    %v198 = vadd.f32 %v196, %v197
    %v199 = vrot.slane %v198, 1
    %v200 = vadd.f32 %v198, %v199
    %v202 = vrot.slane %v193, 2
    %v204 = vsel %vm188, %v202, 0.0
    %v205 = vrot.slane %v204, 4
    %v206 = vadd.f32 %v204, %v205
    %v207 = vrot.slane %v206, 2
    %v208 = vadd.f32 %v206, %v207
    %v209 = vrot.slane %v208, 1
    %v210 = vadd.f32 %v208, %v209
    %v212 = vshra.s32 %v210, 23
    %v213 = vand.u32 %v212, 255
    %v214 = vand.u32 %v210, 8388607
    %vm215 = vcmp.eq.s32.totalorder %v214, 0
    %v216 = vsub.s32 %v213, 127
    %v217 = vsub.s32 %v213, 126
    %v218 = vsel %vm215, %v216, %v217
    %vm219 = vcmp.gt.s32.totalorder %v218, 0
    %v220 = vsel %vm219, %v218, 0
    %vm221 = vcmp.lt.s32.totalorder %v220, 126
    %v222 = vsel %vm221, %v220, 126
    %v223 = vsub.s32 127, %v222
    %v224 = vshll.u32 %v223, 23
    %v226 = vmul.f32 %v200, %v224
    %vm227 = vcmask 0
    %228 = vst.msk [vmem:[#allocation2] sm:$0x1] %vm227, %v226
    // Predicated region
    $region10: #{fixed_hidden_mlp.1} parent=1 // pred_check
      _
    $region11: #{fixed_hidden_mlp.1} parent=1 // pred_check_branch
      %230 = sbr.rel (0) target = $region13
    $region12: #{fixed_hidden_mlp.1} parent=1 // pred_region
      %s232 = ssub.s32 16, 16
      %233 = vsyncadd [#allocation3], %s232
      %s235 = sshll.u32 [#allocation2], 4
      %s236 = int_to_ptr.vmem [resolvable:$true] %s235
      %238 = dma.vmem_to_hbm [thread:$0]  %s236, 16, %s2, [#allocation3]
    $region13: #{fixed_hidden_mlp.1} parent=1 // pred_fallthru
      _
    // Predicated region
    $region14: #{fixed_hidden_mlp.1} parent=1 // pred_check
      _
    $region15: #{fixed_hidden_mlp.1} parent=1 // pred_check_branch
      %240 = sbr.rel (0) target = $region17
    $region16: #{fixed_hidden_mlp.1} parent=1 // pred_region
      %241 = dma.done [#allocation3], 16
    $region17: #{fixed_hidden_mlp.1} parent=1 // pred_fallthru
      _
    %242 = vsyncpa [#allocation3], 1

</llo_original>
